<compile_context>
chip_gen: v6e
topology: v6e:2x2x1
jax: 0.10.0
libtpu: 0.0.40
codegen_flags: <defaults>
</compile_context>

<pallas_src>
import jax
import jax.numpy as jnp
from jax.experimental import pallas as pl
from jax.experimental.pallas import tpu as pltpu

_LANES = 128
_MIN_ROWS_PER_SHARD = 256      # shard across 2 TCs once each shard has >= 256 rows (128 KiB f32)


def _cdiv(a, b):
    return -(-a // b)


def _round_up(a, b):
    return _cdiv(a, b) * b


def _max_tile_rows():
    """Target rows per block: 2 MiB/operand, 4 MiB on 128-MiB-VMEM chips (v5e/v6e)."""
    try:
        vmem = pltpu.get_tpu_info().vmem_capacity_bytes
    except Exception:
        vmem = 64 * 1024 * 1024
    return 8192 if vmem >= 100 * 1024 * 1024 else 4096


def _make_mse_kernel(n_pred: int, steps: int, tile_rows: int, rows_bulk: int, lanes: int):
    """Kernel computing sum((pred_k - tgt)^2) over the lane-dense bulk for n_pred preds."""

    def kernel(*refs):
        pred_refs = refs[:n_pred]
        tgt_ref = refs[n_pred]
        out_refs = refs[n_pred + 1: 2 * n_pred + 1]
        acc_refs = refs[2 * n_pred + 1:]

        p = pl.program_id(0)   # shard (parallel across TensorCores on v7x)
        i = pl.program_id(1)   # reduction axis (sequential)

        @pl.when(i == 0)
        def _init():
            for acc in acc_refs:
                acc[...] = jnp.zeros_like(acc)

        # Row-validity mask from the UNCLAMPED global block index: partial boundary
        # blocks and duplicated (index-clamped) blocks contribute exactly 0.
        start = (p * steps + i) * tile_rows
        valid = rows_bulk - start
        row_ids = jax.lax.broadcasted_iota(jnp.int32, (tile_rows, lanes), 0)
        mask = row_ids < valid

        # Hot loop: pure VPU work; in-kernel cast keeps HBM traffic at native width.
        t = tgt_ref[...].astype(jnp.float32)
        for p_ref, acc in zip(pred_refs, acc_refs):
            d = jnp.where(mask, p_ref[...].astype(jnp.float32) - t, 0.0)
            dd = d * d
            # Fold the whole tile into a single (8,128) vreg with plain vector adds
            # (layout-preserving reshape along sublanes; no XLU work in the hot loop).
            acc[...] += jnp.sum(dd.reshape(tile_rows // 8, 8, lanes), axis=0)

        @pl.when(i == steps - 1)
        def _finalize():
            # One cross-lane/sublane reduce per shard; broadcast the scalar partial
            # sum across the lane-aligned (8, lanes) output block (wrapper reads [0,0]).
            for out_ref, acc in zip(out_refs, acc_refs):
                out_ref[...] = jnp.full((8, lanes), jnp.sum(acc[...]), dtype=jnp.float32)

    return kernel


def _pallas_mse_sums(preds, targets, max_tile_rows=None):
    """List of sum((pred_k - targets)^2) as f32 scalars (division by count done by caller)."""
    n_pred = len(preds)
    n_elem = targets.size
    arrays = list(preds) + [targets]

    # Packed min-tile sublane multiple over native dtypes: f32->8, bf16->16, 8-bit->32.
    sub = max(32 // jnp.dtype(a.dtype).itemsize for a in arrays)
    lane_block = sub * _LANES
    rows_bulk = (n_elem // lane_block) * sub          # whole (sub,128)-aligned rows
    bulk_elems = rows_bulk * _LANES

    sums = [jnp.zeros((), jnp.float32) for _ in range(n_pred)]

    if rows_bulk > 0:
        cap = max_tile_rows if max_tile_rows is not None else _max_tile_rows()
        cap = _round_up(max(cap, sub), sub)

        num_shards = 2 if rows_bulk >= 2 * _MIN_ROWS_PER_SHARD else 1
        # Pick a block count that is a multiple of num_shards so both TensorCores
        # get real work; tile_rows stays a multiple of the packed min-tile.
        nb_target = _round_up(max(_cdiv(rows_bulk, cap), 1), num_shards)
        tile_rows = max(_round_up(_cdiv(rows_bulk, nb_target), sub), sub)
        nb = _cdiv(rows_bulk, tile_rows)              # (nb-1)*tile_rows < rows_bulk
        steps = _cdiv(nb, num_shards)
        last_block = nb - 1

        def bulk_view(x):
            flat = x.reshape(-1)
            if bulk_elems != n_elem:
                flat = flat[:bulk_elems]              # contiguous prefix; tail handled below
            return flat.reshape(rows_bulk, _LANES)    # layout-preserving lane-dense view

        slabs = [bulk_view(a) for a in arrays]

        in_specs = [
            pl.BlockSpec(
                (tile_rows, _LANES),
                # Clamp so an odd block count never produces an out-of-bounds DMA;
                # the kernel masks the duplicated block's contribution to zero.
                lambda p, i: (jnp.minimum(p * steps + i, last_block), 0),
            )
            for _ in range(n_pred + 1)
        ]
        out_specs = [
            pl.BlockSpec((8, _LANES), lambda p, i: (p, 0)) for _ in range(n_pred)
        ]
        scratch_shapes = [
            pltpu.VMEM((8, _LANES), jnp.float32) for _ in range(n_pred)
        ]

        # 2 pipeline buffers per streamed input at native width, plus headroom.
        vmem_limit = int(
            sum(2 * tile_rows * _LANES * jnp.dtype(a.dtype).itemsize for a in arrays)
            + 8 * 1024 * 1024
        )

        outs = pl.pallas_call(
            _make_mse_kernel(n_pred, steps, tile_rows, rows_bulk, _LANES),
            out_shape=[
                jax.ShapeDtypeStruct((num_shards * 8, _LANES), jnp.float32)
                for _ in range(n_pred)
            ],
            grid_spec=pltpu.PrefetchScalarGridSpec(
                num_scalar_prefetch=0,
                grid=(num_shards, steps),
                in_specs=in_specs,
                out_specs=out_specs,
                scratch_shapes=scratch_shapes,
            ),
            compiler_params=pltpu.CompilerParams(
                # outer axis shards across TensorCores (v7x); inner axis carries the
                # running accumulator and must stay sequential.
                dimension_semantics=("parallel", "arbitrary"),
                vmem_limit_bytes=vmem_limit,
                # Let XLA fuse any residual slice/cast producer into the input DMA
                # instead of materializing an extra HBM copy.
                allow_input_fusion=[True] * (n_pred + 1),
            ),
        )(*slabs)

        if n_pred == 1 and not isinstance(outs, (list, tuple)):
            outs = [outs]
        sums = [s + jnp.sum(o[::8, 0]) for s, o in zip(sums, outs)]

    if bulk_elems != n_elem:
        # Ragged tail: fewer than sub*128 elements — negligible wrapper-side work.
        t_tail = targets.reshape(-1)[bulk_elems:].astype(jnp.float32)
        for k, pred in enumerate(preds):
            p_tail = pred.reshape(-1)[bulk_elems:].astype(jnp.float32)
            sums[k] = sums[k] + jnp.sum((p_tail - t_tail) ** 2)

    return sums


def nerf_mse_loss(inputs: dict, targets: jax.Array, *, max_tile_rows=None):
    """Mirror of NeRFMSELoss.forward: returns (loss_coarse, loss_fine)."""
    result = {
        "rgb_coarse": jnp.zeros((), jnp.float32),
        "rgb_fine": jnp.zeros((), jnp.float32),
    }
    keys = [k for k in ("rgb_coarse", "rgb_fine") if k in inputs]
    if keys:
        preds = [inputs[k] for k in keys]
        for p in preds:
            assert p.shape == targets.shape, "prediction/target shape mismatch"
        sums = _pallas_mse_sums(preds, targets, max_tile_rows=max_tile_rows)
        inv_count = jnp.float32(1.0 / targets.size)  # divide by the ORIGINAL element count
        for k, s in zip(keys, sums):
            result[k] = s * inv_count
    return result["rgb_coarse"], result["rgb_fine"]


if __name__ == "__main__":
    key = jax.random.PRNGKey(0)
    k1, k2, k3 = jax.random.split(key, 3)

    # Small NeRF ray batch: (N_rays, 3) rgb — lane-aligned (1024*3 elements), zero-copy path.
    n_rays = 1024
    targets = jax.random.uniform(k1, (n_rays, 3), dtype=jnp.float32)
    inputs = {
        "rgb_coarse": jax.random.uniform(k2, (n_rays, 3), dtype=jnp.float32),
        "rgb_fine": jax.random.uniform(k3, (n_rays, 3), dtype=jnp.float32),
    }
    loss_coarse, loss_fine = nerf_mse_loss(inputs, targets)
    jax.block_until_ready((loss_coarse, loss_fine))

    ref_c = jnp.mean((inputs["rgb_coarse"] - targets) ** 2)
    ref_f = jnp.mean((inputs["rgb_fine"] - targets) ** 2)
    assert jnp.allclose(loss_coarse, ref_c, rtol=3e-5, atol=1e-6)
    assert jnp.allclose(loss_fine, ref_f, rtol=3e-5, atol=1e-6)

    # Non-lane-aligned ray count: exercises in-kernel row masking, the wrapper tail,
    # and the 2-shard ("parallel" outer axis) split.
    kb1, kb2, kb3 = jax.random.split(jax.random.PRNGKey(1), 3)
    n_big = 200_000
    tgt_b = jax.random.uniform(kb1, (n_big, 3), dtype=jnp.float32)
    in_b = {
        "rgb_coarse": jax.random.uniform(kb2, (n_big, 3), dtype=jnp.float32),
        "rgb_fine": jax.random.uniform(kb3, (n_big, 3), dtype=jnp.float32),
    }
    lcb, lfb = nerf_mse_loss(in_b, tgt_b)
    jax.block_until_ready((lcb, lfb))
    ref_cb = jnp.mean((in_b["rgb_coarse"] - tgt_b) ** 2)
    ref_fb = jnp.mean((in_b["rgb_fine"] - tgt_b) ** 2)
    assert jnp.allclose(lcb, ref_cb, rtol=3e-5, atol=1e-6)
    assert jnp.allclose(lfb, ref_fb, rtol=3e-5, atol=1e-6)

    # Forced small tiles: exercises the multi-step running-accumulator path
    # (init at i==0, finalize at i==steps-1) plus masking + tail at small size.
    km1, km2 = jax.random.split(jax.random.PRNGKey(2), 2)
    n_mid = 20_000
    tgt_m = jax.random.uniform(km1, (n_mid, 3), dtype=jnp.float32)
    in_m = {"rgb_coarse": jax.random.uniform(km2, (n_mid, 3), dtype=jnp.float32)}
    lcm, lfm = nerf_mse_loss(in_m, tgt_m, max_tile_rows=64)
    jax.block_until_ready((lcm, lfm))
    ref_cm = jnp.mean((in_m["rgb_coarse"] - tgt_m) ** 2)
    assert jnp.allclose(lcm, ref_cm, rtol=3e-5, atol=1e-6)
    assert float(lfm) == 0.0

    # Missing-key handling: only the coarse prediction provided.
    lc1, lf1 = nerf_mse_loss({"rgb_coarse": inputs["rgb_coarse"]}, targets)
    jax.block_until_ready((lc1, lf1))
    assert jnp.allclose(lc1, ref_c, rtol=3e-5, atol=1e-6)
    assert float(lf1) == 0.0

    # bf16 prediction kept in its native dtype (cast happens inside the kernel).
    pred_bf16 = inputs["rgb_fine"].astype(jnp.bfloat16)
    lcbf, _ = nerf_mse_loss({"rgb_coarse": pred_bf16}, targets)
    jax.block_until_ready(lcbf)
    ref_bf = jnp.mean((pred_bf16.astype(jnp.float32) - targets) ** 2)
    assert jnp.allclose(lcbf, ref_bf, rtol=3e-5, atol=1e-6)

    print("KERNEL_OK")
</pallas_src>

<mosaic_0001>
module attributes {stable_mosaic.version = 11 : i64} {
  func.func @kernel(%arg0: i32, %arg1: i32, %arg2: memref<24x128xf32, #tpu.memory_space<vmem>>, %arg3: memref<24x128xf32, #tpu.memory_space<vmem>>, %arg4: memref<24x128xf32, #tpu.memory_space<vmem>>, %arg5: memref<8x128xf32, #tpu.memory_space<vmem>>, %arg6: memref<8x128xf32, #tpu.memory_space<vmem>>, %arg7: memref<8x128xf32, #tpu.memory_space<vmem>>, %arg8: memref<8x128xf32, #tpu.memory_space<vmem>>) attributes {dimension_semantics = [#tpu.dimension_semantics<parallel>, #tpu.dimension_semantics<arbitrary>], iteration_bounds = array<i64: 1, 1>, scalar_prefetch = 0 : i64, scratch_operands = 2 : i64, tpu.core_type = #tpu.core_type<tc>, window_params = [{transform_indices = @transform_0, window_bounds = array<i64: 24, 128>}, {transform_indices = @transform_1, window_bounds = array<i64: 24, 128>}, {transform_indices = @transform_2, window_bounds = array<i64: 24, 128>}, {transform_indices = @transform_3, window_bounds = array<i64: 8, 128>}, {transform_indices = @transform_4, window_bounds = array<i64: 8, 128>}]} {
    %c0_i32 = arith.constant 0 : i32
    %0 = arith.cmpi eq, %arg1, %c0_i32 : i32
    %1 = arith.extui %0 : i1 to i32
    %c0_i32_0 = arith.constant 0 : i32
    %2 = arith.cmpi ne, %1, %c0_i32_0 : i32
    scf.if %2 {
      %cst_20 = arith.constant 0.000000e+00 : f32
      %34 = vector.broadcast %cst_20 : f32 to vector<8x128xf32>
      %c0_21 = arith.constant 0 : index
      %c0_22 = arith.constant 0 : index
      %35 = vector.load %arg7[%c0_21, %c0_22] : memref<8x128xf32, #tpu.memory_space<vmem>>, vector<8x128xf32>
      tpu.vector_store %arg7[%c0_21, %c0_22], %34 {strides = array<i32>} : memref<8x128xf32, #tpu.memory_space<vmem>>, vector<8x128xf32>,
      %cst_23 = arith.constant 0.000000e+00 : f32
      %36 = vector.broadcast %cst_23 : f32 to vector<8x128xf32>
      %c0_24 = arith.constant 0 : index
      %c0_25 = arith.constant 0 : index
      %37 = vector.load %arg8[%c0_24, %c0_25] : memref<8x128xf32, #tpu.memory_space<vmem>>, vector<8x128xf32>
      tpu.vector_store %arg8[%c0_24, %c0_25], %36 {strides = array<i32>} : memref<8x128xf32, #tpu.memory_space<vmem>>, vector<8x128xf32>,
    } else {
    }
    %c1_i32 = arith.constant 1 : i32
    %3 = arith.muli %arg0, %c1_i32 : i32
    %4 = arith.addi %3, %arg1 : i32
    %c24_i32 = arith.constant 24 : i32
    %5 = arith.muli %4, %c24_i32 : i32
    %c24_i32_1 = arith.constant 24 : i32
    %6 = arith.subi %c24_i32_1, %5 : i32
    %7 = tpu.iota {dimensions = array<i32: 0>} : vector<24x128xi32>
    %8 = vector.broadcast %6 : i32 to vector<24x128xi32>
    %9 = arith.cmpi slt, %7, %8 : vector<24x128xi32>
    %c0 = arith.constant 0 : index
    %c0_2 = arith.constant 0 : index
    %10 = vector.load %arg4[%c0, %c0_2] : memref<24x128xf32, #tpu.memory_space<vmem>>, vector<24x128xf32>
    %c0_3 = arith.constant 0 : index
    %c0_4 = arith.constant 0 : index
    %11 = vector.load %arg2[%c0_3, %c0_4] : memref<24x128xf32, #tpu.memory_space<vmem>>, vector<24x128xf32>
    %12 = arith.subf %11, %10 : vector<24x128xf32>
    %cst = arith.constant 0.000000e+00 : f32
    %13 = vector.broadcast %cst : f32 to vector<24x128xf32>
    %14 = arith.select %9, %12, %13 : vector<24x128xi1>, vector<24x128xf32>
    %15 = arith.mulf %14, %14 : vector<24x128xf32>
    %c0_5 = arith.constant 0 : index
    %c0_6 = arith.constant 0 : index
    %16 = vector.load %arg7[%c0_5, %c0_6] : memref<8x128xf32, #tpu.memory_space<vmem>>, vector<8x128xf32>
    %17 = vector.shape_cast %15 : vector<24x128xf32> to vector<3x8x128xf32>
    %cst_7 = arith.constant dense<0.000000e+00> : vector<8x128xf32>
    %18 = vector.multi_reduction <add>, %17, %cst_7 [0] : vector<3x8x128xf32> to vector<8x128xf32>
    %19 = arith.addf %16, %18 : vector<8x128xf32>
    %c0_8 = arith.constant 0 : index
    %c0_9 = arith.constant 0 : index
    %20 = vector.load %arg7[%c0_8, %c0_9] : memref<8x128xf32, #tpu.memory_space<vmem>>, vector<8x128xf32>
    tpu.vector_store %arg7[%c0_8, %c0_9], %19 {strides = array<i32>} : memref<8x128xf32, #tpu.memory_space<vmem>>, vector<8x128xf32>,
    %c0_10 = arith.constant 0 : index
    %c0_11 = arith.constant 0 : index
    %21 = vector.load %arg3[%c0_10, %c0_11] : memref<24x128xf32, #tpu.memory_space<vmem>>, vector<24x128xf32>
    %22 = arith.subf %21, %10 : vector<24x128xf32>
    %cst_12 = arith.constant 0.000000e+00 : f32
    %23 = vector.broadcast %cst_12 : f32 to vector<24x128xf32>
    %24 = arith.select %9, %22, %23 : vector<24x128xi1>, vector<24x128xf32>
    %25 = arith.mulf %24, %24 : vector<24x128xf32>
    %c0_13 = arith.constant 0 : index
    %c0_14 = arith.constant 0 : index
    %26 = vector.load %arg8[%c0_13, %c0_14] : memref<8x128xf32, #tpu.memory_space<vmem>>, vector<8x128xf32>
    %27 = vector.shape_cast %25 : vector<24x128xf32> to vector<3x8x128xf32>
    %cst_15 = arith.constant dense<0.000000e+00> : vector<8x128xf32>
    %28 = vector.multi_reduction <add>, %27, %cst_15 [0] : vector<3x8x128xf32> to vector<8x128xf32>
    %29 = arith.addf %26, %28 : vector<8x128xf32>
    %c0_16 = arith.constant 0 : index
    %c0_17 = arith.constant 0 : index
    %30 = vector.load %arg8[%c0_16, %c0_17] : memref<8x128xf32, #tpu.memory_space<vmem>>, vector<8x128xf32>
    tpu.vector_store %arg8[%c0_16, %c0_17], %29 {strides = array<i32>} : memref<8x128xf32, #tpu.memory_space<vmem>>, vector<8x128xf32>,
    %c0_i32_18 = arith.constant 0 : i32
    %31 = arith.cmpi eq, %arg1, %c0_i32_18 : i32
    %32 = arith.extui %31 : i1 to i32
    %c0_i32_19 = arith.constant 0 : i32
    %33 = arith.cmpi ne, %32, %c0_i32_19 : i32
    scf.if %33 {
      %c0_20 = arith.constant 0 : index
      %c0_21 = arith.constant 0 : index
      %34 = vector.load %arg7[%c0_20, %c0_21] : memref<8x128xf32, #tpu.memory_space<vmem>>, vector<8x128xf32>
      %35 = vector.shape_cast %34 : vector<8x128xf32> to vector<1x8x128xf32>
      %cst_22 = arith.constant dense<0.000000e+00> : vector<1xf32>
      %36 = vector.multi_reduction <add>, %35, %cst_22 [1, 2] : vector<1x8x128xf32> to vector<1xf32>
      %37 = vector.shape_cast %36 : vector<1xf32> to vector<1x1x1xf32>
      %38 = vector.extract %37[0, 0, 0] : f32 from vector<1x1x1xf32>
      %39 = vector.broadcast %38 : f32 to vector<8x128xf32>
      %c0_23 = arith.constant 0 : index
      %c0_24 = arith.constant 0 : index
      %40 = vector.load %arg5[%c0_23, %c0_24] : memref<8x128xf32, #tpu.memory_space<vmem>>, vector<8x128xf32>
      tpu.vector_store %arg5[%c0_23, %c0_24], %39 {strides = array<i32>} : memref<8x128xf32, #tpu.memory_space<vmem>>, vector<8x128xf32>,
      %c0_25 = arith.constant 0 : index
      %c0_26 = arith.constant 0 : index
      %41 = vector.load %arg8[%c0_25, %c0_26] : memref<8x128xf32, #tpu.memory_space<vmem>>, vector<8x128xf32>
      %42 = vector.shape_cast %41 : vector<8x128xf32> to vector<1x8x128xf32>
      %cst_27 = arith.constant dense<0.000000e+00> : vector<1xf32>
      %43 = vector.multi_reduction <add>, %42, %cst_27 [1, 2] : vector<1x8x128xf32> to vector<1xf32>
      %44 = vector.shape_cast %43 : vector<1xf32> to vector<1x1x1xf32>
      %45 = vector.extract %44[0, 0, 0] : f32 from vector<1x1x1xf32>
      %46 = vector.broadcast %45 : f32 to vector<8x128xf32>
      %c0_28 = arith.constant 0 : index
      %c0_29 = arith.constant 0 : index
      %47 = vector.load %arg6[%c0_28, %c0_29] : memref<8x128xf32, #tpu.memory_space<vmem>>, vector<8x128xf32>
      tpu.vector_store %arg6[%c0_28, %c0_29], %46 {strides = array<i32>} : memref<8x128xf32, #tpu.memory_space<vmem>>, vector<8x128xf32>,
    } else {
    }
    return
  }
  func.func @transform_0(%arg0: i32, %arg1: i32) -> (i32, i32) {
    %c1_i32 = arith.constant 1 : i32
    %0 = arith.muli %arg0, %c1_i32 : i32
    %1 = arith.addi %0, %arg1 : i32
    %c0_i32 = arith.constant 0 : i32
    %2 = arith.minsi %1, %c0_i32 : i32
    %c0_i32_0 = arith.constant 0 : i32
    %c0_i32_1 = arith.constant 0 : i32
    return %2, %c0_i32_0 : i32, i32
  }
  func.func @transform_1(%arg0: i32, %arg1: i32) -> (i32, i32) {
    %c1_i32 = arith.constant 1 : i32
    %0 = arith.muli %arg0, %c1_i32 : i32
    %1 = arith.addi %0, %arg1 : i32
    %c0_i32 = arith.constant 0 : i32
    %2 = arith.minsi %1, %c0_i32 : i32
    %c0_i32_0 = arith.constant 0 : i32
    %c0_i32_1 = arith.constant 0 : i32
    return %2, %c0_i32_0 : i32, i32
  }
  func.func @transform_2(%arg0: i32, %arg1: i32) -> (i32, i32) {
    %c1_i32 = arith.constant 1 : i32
    %0 = arith.muli %arg0, %c1_i32 : i32
    %1 = arith.addi %0, %arg1 : i32
    %c0_i32 = arith.constant 0 : i32
    %2 = arith.minsi %1, %c0_i32 : i32
    %c0_i32_0 = arith.constant 0 : i32
    %c0_i32_1 = arith.constant 0 : i32
    return %2, %c0_i32_0 : i32, i32
  }
  func.func @transform_3(%arg0: i32, %arg1: i32) -> (i32, i32) {
    %c0_i32 = arith.constant 0 : i32
    %c0_i32_0 = arith.constant 0 : i32
    return %arg0, %c0_i32 : i32, i32
  }
  func.func @transform_4(%arg0: i32, %arg1: i32) -> (i32, i32) {
    %c0_i32 = arith.constant 0 : i32
    %c0_i32_0 = arith.constant 0 : i32
    return %arg0, %c0_i32 : i32, i32
  }
}

</mosaic_0001>

<llo_original>
// kernel: tpu_custom_call.1
$region0: #{tpu_custom_call.1}
  #allocation0 [shape = 'u32[]', space=smem, size = 0x4, offset = 0x4, fixed_abs, tag = 'smem constant byte address 0x4 - core index']
  #allocation1 [shape = 'u32[144,128]{1,0:T(1,128)}', space=vmem, size = 0x12000, scoped, tag = 'internal scratch']
  #allocation2 [shape = 'f32[8,128]{1,0:T(8,128)}', space=vmem, size = 0x1000, scoped, tag = 'scratch operand']
  #allocation3 [shape = 'f32[8,128]{1,0:T(8,128)}', space=vmem, size = 0x1000, scoped, tag = 'scratch operand']
  %s0 = inlined_call_operand.hbm [shape: f32[24,128], index: 0, kind: input, shape index: {}]
  %s1 = inlined_call_operand.hbm [shape: f32[24,128], index: 1, kind: input, shape index: {}]
  %s2 = inlined_call_operand.hbm [shape: f32[24,128], index: 2, kind: input, shape index: {}]
  %s3 = inlined_call_operand.hbm [shape: f32[8,128], index: 3, kind: output, shape index: {0}]
  %s4 = inlined_call_operand.hbm [shape: f32[8,128], index: 4, kind: output, shape index: {1}]
  %5 = xla_tuple %s3, %s4
  %s6 = sld [smem:[#allocation0]]
  $region50: #{tpu_custom_call.1} parent=0
    _
  %s8 = ssub.s32 1, %s6
  %s9 = scalar_select 0, %s8, %s6
  $region1: #{tpu_custom_call.1} parent=0
    #allocation4 [shape = 'u8[12288]{0}', space=vmem, size = 0x3000, scoped, tag = 'input window, operand 0, single buffered']
    #allocation5 [shape = 's32[1]{0}', space=sflag, size = 0x4, scoped, tag = 'scoped memory for tpu_custom_call.1']
    #allocation6 [shape = 's32[1]{0}', space=sflag, size = 0x4, scoped, tag = 'scoped memory for tpu_custom_call.1']
    #allocation7 [shape = 'u8[12288]{0}', space=vmem, size = 0x3000, scoped, tag = 'input window, operand 1, single buffered']
    #allocation8 [shape = 's32[1]{0}', space=sflag, size = 0x4, scoped, tag = 'scoped memory for tpu_custom_call.1']
    #allocation9 [shape = 'u8[12288]{0}', space=vmem, size = 0x3000, scoped, tag = 'input window, operand 2, single buffered']
    #allocation10 [shape = 'u8[4096]{0}', space=vmem, size = 0x1000, scoped, tag = 'output window, operand 0, single buffered']
    #allocation11 [shape = 'u8[4096]{0}', space=vmem, size = 0x1000, scoped, tag = 'output window, operand 1, single buffered']
    #allocation12 [shape = 's32[1]{0}', space=sflag, size = 0x4, scoped, tag = 'scoped memory for tpu_custom_call.1']
    %10 = vsyncpa [#allocation5], 0
    %11 = vsyncpa [#allocation8], 0
    %12 = vsyncpa [#allocation6], 0
    %13 = vsyncpa [#allocation12], 0
    // Predicated region
    $region2: #{tpu_custom_call.1} parent=1 // pred_check
      _
    $region3: #{tpu_custom_call.1} parent=1 // pred_check_branch
      %15 = sbr.rel (0) target = $region5
    $region4: #{tpu_custom_call.1} parent=1 // pred_region
      %s16 = sadd.s32 0, 0
      %p17 = scmp.lt.s32.totalorder %s16, 0
      %s18 = scalar_select %p17, %s16, 0
      %s19 = smul.u32 3, %s18
      %s21 = ssub.s32 384, 384
      %22 = vsyncadd [#allocation5], %s21
      %s23 = smul.addr %s19, 128
      %s24 = scalar_lea.hbm %s0, %s23
      %s25 = sshll.u32 [#allocation4], 4
      %s26 = int_to_ptr.vmem [resolvable:$true] %s25
      %31 = dma.hbm_to_vmem [thread:$0]  %s24, 384, %s26, [#allocation5], 128, 128, 8
    $region5: #{tpu_custom_call.1} parent=1 // pred_fallthru
      _
    // Predicated region
    $region6: #{tpu_custom_call.1} parent=1 // pred_check
      _
    $region7: #{tpu_custom_call.1} parent=1 // pred_check_branch
      %33 = sbr.rel (0) target = $region9
    $region8: #{tpu_custom_call.1} parent=1 // pred_region
      %s34 = sadd.s32 0, 0
      %p35 = scmp.lt.s32.totalorder %s34, 0
      %s36 = scalar_select %p35, %s34, 0
      %s37 = smul.u32 3, %s36
      %s39 = ssub.s32 384, 384
      %40 = vsyncadd [#allocation8], %s39
      %s41 = smul.addr %s37, 128
      %s42 = scalar_lea.hbm %s1, %s41
      %s43 = sshll.u32 [#allocation7], 4
      %s44 = int_to_ptr.vmem [resolvable:$true] %s43
      %49 = dma.hbm_to_vmem [thread:$0]  %s42, 384, %s44, [#allocation8], 128, 128, 8
    $region9: #{tpu_custom_call.1} parent=1 // pred_fallthru
      _
    // Predicated region
    $region10: #{tpu_custom_call.1} parent=1 // pred_check
      _
    $region11: #{tpu_custom_call.1} parent=1 // pred_check_branch
      %51 = sbr.rel (0) target = $region13
    $region12: #{tpu_custom_call.1} parent=1 // pred_region
      %s52 = sadd.s32 0, 0
      %p53 = scmp.lt.s32.totalorder %s52, 0
      %s54 = scalar_select %p53, %s52, 0
      %s55 = smul.u32 3, %s54
      %s57 = ssub.s32 384, 384
      %58 = vsyncadd [#allocation8], %s57
      %s59 = smul.addr %s55, 128
      %s60 = scalar_lea.hbm %s2, %s59
      %s61 = sshll.u32 [#allocation9], 4
      %s62 = int_to_ptr.vmem [resolvable:$true] %s61
      %67 = dma.hbm_to_vmem [thread:$0]  %s60, 384, %s62, [#allocation8], 128, 128, 8
    $region13: #{tpu_custom_call.1} parent=1 // pred_fallthru
      _
    // Predicated region
    $region14: #{tpu_custom_call.1} parent=1 // pred_check
      _
    $region15: #{tpu_custom_call.1} parent=1 // pred_check_branch
      %69 = sbr.rel (0) target = $region17
    $region16: #{tpu_custom_call.1} parent=1 // pred_region
      %70 = dma.done [#allocation5], 384
    $region17: #{tpu_custom_call.1} parent=1 // pred_fallthru
      _
    // Predicated region
    $region18: #{tpu_custom_call.1} parent=1 // pred_check
      _
    $region19: #{tpu_custom_call.1} parent=1 // pred_check_branch
      %72 = sbr.rel (0) target = $region21
    $region20: #{tpu_custom_call.1} parent=1 // pred_region
      %73 = dma.done [#allocation8], 384
    $region21: #{tpu_custom_call.1} parent=1 // pred_fallthru
      _
    // Predicated region
    $region22: #{tpu_custom_call.1} parent=1 // pred_check
      _
    $region23: #{tpu_custom_call.1} parent=1 // pred_check_branch
      %75 = sbr.rel (0) target = $region25
    $region24: #{tpu_custom_call.1} parent=1 // pred_region
      %76 = dma.done [#allocation8], 384
    $region25: #{tpu_custom_call.1} parent=1 // pred_fallthru
      _
    %s77 = sadd.s32 0, 0
    %p78 = scmp.lt.s32.totalorder %s77, 0
    %s79 = scalar_select %p78, %s77, 0
    %s80 = smul.u32 3, %s79
    %s81 = sadd.s32 0, 0
    %p82 = scmp.lt.s32.totalorder %s81, 0
    %s83 = scalar_select %p82, %s81, 0
    %s84 = smul.u32 3, %s83
    %s85 = sadd.s32 0, 0
    %p86 = scmp.lt.s32.totalorder %s85, 0
    %s87 = scalar_select %p86, %s85, 0
    %s88 = smul.u32 3, %s87
    %p89 = scmp.eq.s32.totalorder 0, 0
    // Predicated region
    $region26: #{tpu_custom_call.1} parent=1 // pred_check
      %p90 = pneg %p89
    $region27: #{tpu_custom_call.1} parent=1 // pred_check_branch
      %92 = sbr.rel (%p90) target = $region29
    $region28: #{tpu_custom_call.1} parent=1 // pred_region
      %93 = vst [vmem:[#allocation2] sm:$0xff] 0.0
      %94 = vst [vmem:[#allocation3] sm:$0xff] 0.0
    $region29: #{tpu_custom_call.1} parent=1 // pred_fallthru
      _
    %s95 = sadd.s32 0, 0
    %s96 = smul.u32 %s95, 24
    %s97 = ssub.s32 24, %s96
    %v98 = vlaneseq
    %v99 = vshrl.u32 %v98, 7
    %v100 = vadd.s32 %v99, 8
    %v101 = vadd.s32 %v99, 16
    %v102 = vstv %s97
    %vm103 = vcmp.lt.s32.totalorder %v99, %v102
    %vm104 = vcmp.lt.s32.totalorder %v100, %v102
    %vm105 = vcmp.lt.s32.totalorder %v101, %v102
    %v106 = vld [vmem:[#allocation9] sm:$0xff]
    %v107 = vld [vmem:[#allocation9 + $0x8] sm:$0xff]
    %v108 = vld [vmem:[#allocation9 + $0x10] sm:$0xff]
    %v109 = vld [vmem:[#allocation4] sm:$0xff]
    %v110 = vld [vmem:[#allocation4 + $0x8] sm:$0xff]
    %v111 = vld [vmem:[#allocation4 + $0x10] sm:$0xff]
    %v112 = vsub.f32 %v109, %v106
    %v113 = vsub.f32 %v110, %v107
    %v114 = vsub.f32 %v111, %v108
    %v115 = vsel %vm103, %v112, 0.0
    %v116 = vsel %vm104, %v113, 0.0
    %v117 = vsel %vm105, %v114, 0.0
    %v118 = vmul.f32 %v115, %v115
    %v119 = vmul.f32 %v116, %v116
    %v120 = vmul.f32 %v117, %v117
    %v121 = vld [vmem:[#allocation2] sm:$0xff]
    %v122 = vadd.f32 %v118, %v119
    %v123 = vadd.f32 %v122, %v120
    %v124 = vadd.f32 %v121, %v123
    %125 = vst [vmem:[#allocation2] sm:$0xff] %v124
    %v126 = vld [vmem:[#allocation7] sm:$0xff]
    %v127 = vld [vmem:[#allocation7 + $0x8] sm:$0xff]
    %v128 = vld [vmem:[#allocation7 + $0x10] sm:$0xff]
    %v129 = vsub.f32 %v126, %v106
    %v130 = vsub.f32 %v127, %v107
    %v131 = vsub.f32 %v128, %v108
    %v132 = vsel %vm103, %v129, 0.0
    %v133 = vsel %vm104, %v130, 0.0
    %v134 = vsel %vm105, %v131, 0.0
    %v135 = vmul.f32 %v132, %v132
    %v136 = vmul.f32 %v133, %v133
    %v137 = vmul.f32 %v134, %v134
    %v138 = vld [vmem:[#allocation3] sm:$0xff]
    %v139 = vadd.f32 %v135, %v136
    %v140 = vadd.f32 %v139, %v137
    %v141 = vadd.f32 %v138, %v140
    %142 = vst [vmem:[#allocation3] sm:$0xff] %v141
    // Predicated region
    $region30: #{tpu_custom_call.1} parent=1 // pred_check
      %p143 = pneg %p89
    $region31: #{tpu_custom_call.1} parent=1 // pred_check_branch
      %145 = sbr.rel (%p143) target = $region33
    $region32: #{tpu_custom_call.1} parent=1 // pred_region
      %v146 = vld [vmem:[#allocation2] sm:$0xff]
      %147 = vadd.xlane.f32.xlu0 %v146
      %v148 = vpop.xlane.xlu0 %147
      %v149 = vrot.slane %v148, 4
      %v150 = vadd.f32 %v148, %v149
      %v151 = vrot.slane %v150, 2
      %v152 = vadd.f32 %v150, %v151
      %v153 = vrot.slane %v152, 1
      %v154 = vadd.f32 %v152, %v153
      %s155 = vtos %v154
      %v156 = vstv %s155
      %157 = vst [vmem:[#allocation10] sm:$0xff] %v156
      %v158 = vld [vmem:[#allocation3] sm:$0xff]
      %159 = vadd.xlane.f32.xlu0 %v158
      %v160 = vpop.xlane.xlu0 %159
      %v161 = vrot.slane %v160, 4
      %v162 = vadd.f32 %v160, %v161
      %v163 = vrot.slane %v162, 2
      %v164 = vadd.f32 %v162, %v163
      %v165 = vrot.slane %v164, 1
      %v166 = vadd.f32 %v164, %v165
      %s167 = vtos %v166
      %v168 = vstv %s167
      %169 = vst [vmem:[#allocation11] sm:$0xff] %v168
    $region33: #{tpu_custom_call.1} parent=1 // pred_fallthru
      _
    // Predicated region
    $region34: #{tpu_custom_call.1} parent=1 // pred_check
      _
    $region35: #{tpu_custom_call.1} parent=1 // pred_check_branch
      %171 = sbr.rel (0) target = $region37
    $region36: #{tpu_custom_call.1} parent=1 // pred_region
      %s173 = ssub.s32 128, 128
      %174 = vsyncadd [#allocation6], %s173
      %s176 = sshll.u32 [#allocation10], 4
      %s177 = int_to_ptr.vmem [resolvable:$true] %s176
      %179 = dma.vmem_to_hbm [thread:$0]  %s177, 128, %s3, [#allocation6]
    $region37: #{tpu_custom_call.1} parent=1 // pred_fallthru
      _
    // Predicated region
    $region38: #{tpu_custom_call.1} parent=1 // pred_check
      _
    $region39: #{tpu_custom_call.1} parent=1 // pred_check_branch
      %181 = sbr.rel (0) target = $region41
    $region40: #{tpu_custom_call.1} parent=1 // pred_region
      %s183 = ssub.s32 128, 128
      %184 = vsyncadd [#allocation12], %s183
      %s186 = sshll.u32 [#allocation11], 4
      %s187 = int_to_ptr.vmem [resolvable:$true] %s186
      %189 = dma.vmem_to_hbm [thread:$0]  %s187, 128, %s4, [#allocation12]
    $region41: #{tpu_custom_call.1} parent=1 // pred_fallthru
      _
    // Predicated region
    $region42: #{tpu_custom_call.1} parent=1 // pred_check
      _
    $region43: #{tpu_custom_call.1} parent=1 // pred_check_branch
      %191 = sbr.rel (0) target = $region45
    $region44: #{tpu_custom_call.1} parent=1 // pred_region
      %192 = dma.done [#allocation6], 128
    $region45: #{tpu_custom_call.1} parent=1 // pred_fallthru
      _
    // Predicated region
    $region46: #{tpu_custom_call.1} parent=1 // pred_check
      _
    $region47: #{tpu_custom_call.1} parent=1 // pred_check_branch
      %194 = sbr.rel (0) target = $region49
    $region48: #{tpu_custom_call.1} parent=1 // pred_region
      %195 = dma.done [#allocation12], 128
    $region49: #{tpu_custom_call.1} parent=1 // pred_fallthru
      _
    %196 = vsyncpa [#allocation5], 1
    %197 = vsyncpa [#allocation8], 1
    %198 = vsyncpa [#allocation6], 1
    %199 = vsyncpa [#allocation12], 1

</llo_original>
